<compile_context>
chip_gen: v6e
topology: v6e:2x2x1
jax: 0.10.0
libtpu: 0.0.40
codegen_flags: <defaults>
</compile_context>

<pallas_src>
import functools
import math

import jax
import jax.numpy as jnp
from jax.experimental import pallas as pl
from jax.experimental.pallas import tpu as pltpu

_LANE = 128                       # lane width: last-dim tiling unit
_VMEM_BUDGET = 56 * 1024 * 1024   # stay under v7x's 64 MiB physical VMEM


def _cdiv(a, b):
    return (a + b - 1) // b


def _round_up(x, m):
    return ((x + m - 1) // m) * m


def _min_sublane(dtype):
    # f32 -> 8, bf16 -> 16, int8/fp8 -> 32 sublanes minimum.
    return max(8, 32 // jnp.dtype(dtype).itemsize)


def _sine_linear_kernel(x_ref, w_ref, b_ref, o_ref, *, scale):
    # x_ref: (tm, K)  w_ref: (K, tn)  b_ref: (1, tn) f32  o_ref: (tm, tn)
    acc = jnp.dot(x_ref[...], w_ref[...],
                  preferred_element_type=jnp.float32)       # MXU, f32 accumulate
    acc = acc + b_ref[...]                                   # f32 bias broadcast
    if scale != 1.0:                                         # static; bf16-weight
        acc = acc * jnp.float32(scale)                       # first layer only
    o_ref[...] = jnp.sin(acc).astype(o_ref.dtype)            # sine


def prepare_params(weight, bias, *, is_first, omega_0=30.0, param_dtype=None):
    """One-time parameter prep (do NOT call per forward step).

    - f32 path (param_dtype=None): folds omega_0 into W/b -> no in-kernel scale.
    - reduced-precision path (e.g. bf16): stores W in param_dtype, keeps bias in
      f32 and returns scale=omega_0 to be applied in f32 inside the kernel.
    - Pre-transposes W to (in_features, out_features) and pads the out-feature
      axis to a multiple of 128 (lane-dense, unmasked stores).
    Returns (w_kn, b_1n, out_features, scale).
    """
    out_features, in_features = weight.shape
    omega = float(omega_0)
    w = jnp.asarray(weight, jnp.float32).T                      # (K, N)
    b = jnp.asarray(bias, jnp.float32).reshape(1, out_features)  # (1, N), f32

    if param_dtype is None or jnp.dtype(param_dtype) == jnp.dtype(jnp.float32):
        scale = 1.0
        if is_first:
            w = w * omega
            b = b * omega
        w = w.astype(jnp.float32)
    else:
        scale = omega if is_first else 1.0     # applied in f32 post-accumulate
        w = w.astype(param_dtype)

    n_pad = _round_up(out_features, _LANE)
    if n_pad != out_features:
        w = jnp.pad(w, ((0, 0), (0, n_pad - out_features)))
        b = jnp.pad(b, ((0, 0), (0, n_pad - out_features)))
    return w, b, out_features, scale


def sine_layer_apply(x, w_kn, b_1n, out_features, *, scale=1.0, tm_max=512,
                     out_dtype=None, keep_padded=False):
    """Apply the sine layer. x: (M, K); w_kn: (K, N_pad); b_1n: (1, N_pad) f32.

    Set keep_padded=True when stacking layers to keep the lane-padded width
    end-to-end (padded columns are exactly sin(0)=0) and slice only once at
    the very end of the network.
    """
    M, K = x.shape
    K_w, N_pad = w_kn.shape
    assert K == K_w, "in_features mismatch"
    assert N_pad % _LANE == 0, "prepared weight must be lane-padded"

    out_dtype = x.dtype if out_dtype is None else out_dtype
    x_it = jnp.dtype(x.dtype).itemsize
    w_it = jnp.dtype(w_kn.dtype).itemsize
    b_it = jnp.dtype(b_1n.dtype).itemsize
    o_it = jnp.dtype(out_dtype).itemsize

    # Balanced row tiling: bounds padding to < one sublane group per tile
    # instead of up to a whole tile of dead rows on awkward batch sizes.
    sub = max(_min_sublane(x.dtype), _min_sublane(out_dtype))
    n_row_tiles = _cdiv(M, max(tm_max, sub))
    tm = _round_up(_cdiv(M, n_row_tiles), sub)
    m_pad = n_row_tiles * tm
    if m_pad != M:
        x = jnp.pad(x, ((0, m_pad - M), (0, 0)))

    cost = pl.CostEstimate(
        flops=2 * m_pad * N_pad * K,
        transcendentals=m_pad * N_pad,
        bytes_accessed=(m_pad * K * x_it + K * N_pad * w_it
                        + N_pad * b_it + m_pad * N_pad * o_it),
    )
    kernel = functools.partial(_sine_linear_kernel, scale=float(scale))

    # Primary path: keep the (small) SIREN weight + bias resident in VMEM.
    # 1-D grid over row tiles; weight/bias block index never changes, so Pallas
    # DMAs them once and never re-fetches. (2x for pessimistic double-buffer.)
    resident_bytes = 2 * (K * N_pad * w_it + N_pad * b_it)
    tile_bytes = 2 * (tm * K * x_it + tm * N_pad * o_it)

    if resident_bytes + tile_bytes <= _VMEM_BUDGET:
        grid = (m_pad // tm,)
        in_specs = [
            pl.BlockSpec((tm, K), lambda i: (i, 0)),        # x row tile
            pl.BlockSpec((K, N_pad), lambda i: (0, 0)),     # full weight, resident
            pl.BlockSpec((1, N_pad), lambda i: (0, 0)),     # full bias, resident
        ]
        out_specs = pl.BlockSpec((tm, N_pad), lambda i: (i, 0))
        semantics = ("parallel",)
        vmem_need = resident_bytes + tile_bytes
    else:
        # Fallback for very wide layers: tile the out-feature axis. That axis
        # is OUTERMOST so each weight column tile is DMA'd only once and reused
        # across every row tile (x is re-streamed instead, the cheaper option
        # once the weight no longer fits).
        tn = 512 if N_pad % 512 == 0 else (256 if N_pad % 256 == 0 else _LANE)
        grid = (N_pad // tn, m_pad // tm)
        in_specs = [
            pl.BlockSpec((tm, K), lambda j, i: (i, 0)),
            pl.BlockSpec((K, tn), lambda j, i: (0, j)),
            pl.BlockSpec((1, tn), lambda j, i: (0, j)),
        ]
        out_specs = pl.BlockSpec((tm, tn), lambda j, i: (i, j))
        semantics = ("parallel", "parallel")
        vmem_need = 2 * (tm * K * x_it + K * tn * w_it + tn * b_it + tm * tn * o_it)

    vmem_limit = int(min(max(vmem_need + (8 << 20), 32 << 20), _VMEM_BUDGET))

    out = pl.pallas_call(
        kernel,
        out_shape=jax.ShapeDtypeStruct((m_pad, N_pad), out_dtype),
        grid_spec=pltpu.PrefetchScalarGridSpec(
            num_scalar_prefetch=0,
            grid=grid,
            in_specs=in_specs,
            out_specs=out_specs,
        ),
        compiler_params=pltpu.CompilerParams(
            dimension_semantics=semantics,
            vmem_limit_bytes=vmem_limit,
        ),
        cost_estimate=cost,
    )(x, w_kn, b_1n)

    if keep_padded:
        return out
    if m_pad != M or N_pad != out_features:
        out = out[:M, :out_features]
    return out


def sine_activation_layer(x, weight, bias, *, is_first, omega_0=30.0,
                          param_dtype=None, **apply_kwargs):
    """One-shot API matching the PyTorch module's forward.

    For multi-layer / repeated use, call prepare_params once per layer and
    reuse sine_layer_apply (with keep_padded=True between layers).
    """
    w_kn, b_1n, n_out, scale = prepare_params(
        weight, bias, is_first=is_first, omega_0=omega_0, param_dtype=param_dtype)
    return sine_layer_apply(x, w_kn, b_1n, n_out, scale=scale, **apply_kwargs)


def init_params(key, in_features, out_features, is_first):
    """Deterministic SIREN-style init matching the PyTorch module."""
    kw, kb = jax.random.split(key)
    bound_w = (1.0 / in_features) if is_first else math.sqrt(6.0 / in_features)
    weight = jax.random.uniform(
        kw, (out_features, in_features), jnp.float32, -bound_w, bound_w)
    bound_b = 1.0 / math.sqrt(in_features)   # nn.Linear default bias init
    bias = jax.random.uniform(kb, (out_features,), jnp.float32, -bound_b, bound_b)
    return weight, bias


if __name__ == "__main__":
    key = jax.random.PRNGKey(0)
    k_x, k_p = jax.random.split(key)

    # Small demo shapes (functional check; real SIREN widths of 256+ hit the
    # same VMEM-resident weight path with no lane padding at all).
    batch, in_features, out_features = 8, 16, 32
    is_first = True
    omega_0 = 30.0

    x = jax.random.normal(k_x, (batch, in_features), jnp.float32)
    weight, bias = init_params(k_p, in_features, out_features, is_first)

    # One-time prep (transpose + omega fold + lane padding), then apply.
    w_kn, b_1n, n_out, scale = prepare_params(
        weight, bias, is_first=is_first, omega_0=omega_0)
    out = sine_layer_apply(x, w_kn, b_1n, n_out, scale=scale)
    out = jax.block_until_ready(out)

    # Pure-JAX reference check (original, unfolded parameterization).
    lin = x @ weight.T + bias
    ref = jnp.sin(omega_0 * lin) if is_first else jnp.sin(lin)
    assert out.shape == (batch, out_features)
    assert jnp.allclose(out, ref, atol=1e-4, rtol=1e-4), "mismatch vs reference"

    print("KERNEL_OK")
</pallas_src>

<mosaic_0001>
module attributes {stable_mosaic.version = 11 : i64} {
  func.func @_sine_linear_kernel(%arg0: i32, %arg1: memref<8x16xf32, #tpu.memory_space<vmem>>, %arg2: memref<16x128xf32, #tpu.memory_space<vmem>>, %arg3: memref<1x128xf32, #tpu.memory_space<vmem>>, %arg4: memref<8x128xf32, #tpu.memory_space<vmem>>) attributes {dimension_semantics = [#tpu.dimension_semantics<parallel>], iteration_bounds = array<i64: 1>, scalar_prefetch = 0 : i64, scratch_operands = 0 : i64, tpu.core_type = #tpu.core_type<tc>, window_params = [{transform_indices = @transform_0, window_bounds = array<i64: 8, 16>}, {pipeline_mode = #tpu.pipeline_mode<synchronous>, transform_indices = @transform_1, window_bounds = array<i64: 16, 128>}, {pipeline_mode = #tpu.pipeline_mode<synchronous>, transform_indices = @transform_2, window_bounds = array<i64: 1, 128>}, {transform_indices = @transform_3, window_bounds = array<i64: 8, 128>}]} {
    %c0 = arith.constant 0 : index
    %c0_0 = arith.constant 0 : index
    %0 = vector.load %arg1[%c0, %c0_0] : memref<8x16xf32, #tpu.memory_space<vmem>>, vector<8x16xf32>
    %c0_1 = arith.constant 0 : index
    %c0_2 = arith.constant 0 : index
    %1 = vector.load %arg2[%c0_1, %c0_2] : memref<16x128xf32, #tpu.memory_space<vmem>>, vector<16x128xf32>
    %cst = arith.constant dense<0.000000e+00> : vector<8x128xf32>
    %2 = tpu.matmul %0, %1, %cst {dimension_numbers = #tpu.dot_dimension_numbers<[1], [0], [0], [1], [0, 0, 1, 1], [], []>} : vector<8x16xf32>, vector<16x128xf32>, vector<8x128xf32> -> vector<8x128xf32>
    %c0_3 = arith.constant 0 : index
    %c0_4 = arith.constant 0 : index
    %3 = vector.load %arg3[%c0_3, %c0_4] : memref<1x128xf32, #tpu.memory_space<vmem>>, vector<1x128xf32>
    %4 = vector.broadcast %3 : vector<1x128xf32> to vector<8x128xf32>
    %5 = arith.addf %2, %4 : vector<8x128xf32>
    %6 = math.sin %5 : vector<8x128xf32>
    %c0_5 = arith.constant 0 : index
    %c0_6 = arith.constant 0 : index
    %7 = vector.load %arg4[%c0_5, %c0_6] : memref<8x128xf32, #tpu.memory_space<vmem>>, vector<8x128xf32>
    tpu.vector_store %arg4[%c0_5, %c0_6], %6 {strides = array<i32>} : memref<8x128xf32, #tpu.memory_space<vmem>>, vector<8x128xf32>,
    return
  }
  func.func @transform_0(%arg0: i32) -> (i32, i32) {
    %c0_i32 = arith.constant 0 : i32
    %c0_i32_0 = arith.constant 0 : i32
    return %arg0, %c0_i32 : i32, i32
  }
  func.func @transform_1(%arg0: i32) -> (i32, i32) {
    %c0_i32 = arith.constant 0 : i32
    %c0_i32_0 = arith.constant 0 : i32
    %c0_i32_1 = arith.constant 0 : i32
    return %c0_i32, %c0_i32_0 : i32, i32
  }
  func.func @transform_2(%arg0: i32) -> (i32, i32) {
    %c0_i32 = arith.constant 0 : i32
    %c0_i32_0 = arith.constant 0 : i32
    %c0_i32_1 = arith.constant 0 : i32
    return %c0_i32, %c0_i32_0 : i32, i32
  }
  func.func @transform_3(%arg0: i32) -> (i32, i32) {
    %c0_i32 = arith.constant 0 : i32
    %c0_i32_0 = arith.constant 0 : i32
    return %arg0, %c0_i32 : i32, i32
  }
}

</mosaic_0001>

<llo_original>
// kernel: tpu_custom_call.1
$region0: #{tpu_custom_call.1}
  #allocation0 [shape = 'u32[]', space=smem, size = 0x4, offset = 0x4, fixed_abs, tag = 'smem constant byte address 0x4 - core index']
  #allocation1 [shape = 'u32[144,128]{1,0:T(1,128)}', space=vmem, size = 0x12000, scoped, tag = 'internal scratch']
  %s0 = inlined_call_operand.hbm [shape: f32[8,16], index: 0, kind: input, shape index: {}]
  %s1 = inlined_call_operand.hbm [shape: f32[16,128], index: 1, kind: input, shape index: {}]
  %s2 = inlined_call_operand.vmem [shape: f32[1,128], index: 2, kind: input, shape index: {}]
  %s3 = inlined_call_operand.hbm [shape: f32[8,128], index: 3, kind: output, shape index: {}]
  %s4 = sld [smem:[#allocation0]]
  $region30: #{tpu_custom_call.1} parent=0
    _
  %s6 = ssub.s32 1, %s4
  %s7 = scalar_select 0, %s6, %s4
  $region1: #{tpu_custom_call.1} parent=0
    #allocation2 [shape = 'u8[4096]{0}', space=vmem, size = 0x1000, scoped, tag = 'input window, operand 0, single buffered']
    #allocation3 [shape = 's32[1]{0}', space=sflag, size = 0x4, scoped, tag = 'scoped memory for tpu_custom_call.1']
    #allocation4 [shape = 's32[1]{0}', space=sflag, size = 0x4, scoped, tag = 'scoped memory for tpu_custom_call.1']
    #allocation5 [shape = 'u8[8192]{0}', space=vmem, size = 0x2000, scoped, tag = 'input window, operand 1, single buffered']
    #allocation6 [shape = 's32[1]{0}', space=sflag, size = 0x4, scoped, tag = 'scoped memory for tpu_custom_call.1']
    #allocation7 [shape = 'u8[4096]{0}', space=vmem, size = 0x1000, scoped, tag = 'output window, operand 0, single buffered']
    %8 = vsyncpa [#allocation3], 0
    %9 = vsyncpa [#allocation6], 0
    %10 = vsyncpa [#allocation4], 0
    // Predicated region
    $region2: #{tpu_custom_call.1} parent=1 // pred_check
      _
    $region3: #{tpu_custom_call.1} parent=1 // pred_check_branch
      %12 = sbr.rel (0) target = $region5
    $region4: #{tpu_custom_call.1} parent=1 // pred_region
      %s14 = ssub.s32 128, 128
      %15 = vsyncadd [#allocation3], %s14
      %s17 = sshll.u32 [#allocation2], 4
      %s18 = int_to_ptr.vmem [resolvable:$true] %s17
      %20 = dma.hbm_to_vmem [thread:$0]  %s0, 128, %s18, [#allocation3]
    $region5: #{tpu_custom_call.1} parent=1 // pred_fallthru
      _
    // Predicated region
    $region6: #{tpu_custom_call.1} parent=1 // pred_check
      _
    $region7: #{tpu_custom_call.1} parent=1 // pred_check_branch
      %22 = sbr.rel (0) target = $region9
    $region8: #{tpu_custom_call.1} parent=1 // pred_region
      %s24 = ssub.s32 256, 256
      %25 = vsyncadd [#allocation6], %s24
      %s26 = sshll.u32 [#allocation5], 4
      %s27 = int_to_ptr.vmem [resolvable:$true] %s26
      %32 = dma.hbm_to_vmem [thread:$0]  %s1, 256, %s27, [#allocation6], 128, 128, 8
    $region9: #{tpu_custom_call.1} parent=1 // pred_fallthru
      _
    // Predicated region
    $region10: #{tpu_custom_call.1} parent=1 // pred_check
      _
    $region11: #{tpu_custom_call.1} parent=1 // pred_check_branch
      %34 = sbr.rel (0) target = $region13
    $region12: #{tpu_custom_call.1} parent=1 // pred_region
      _
    $region13: #{tpu_custom_call.1} parent=1 // pred_fallthru
      _
    // Predicated region
    $region14: #{tpu_custom_call.1} parent=1 // pred_check
      _
    $region15: #{tpu_custom_call.1} parent=1 // pred_check_branch
      %36 = sbr.rel (0) target = $region17
    $region16: #{tpu_custom_call.1} parent=1 // pred_region
      %37 = dma.done [#allocation3], 128
    $region17: #{tpu_custom_call.1} parent=1 // pred_fallthru
      _
    // Predicated region
    $region18: #{tpu_custom_call.1} parent=1 // pred_check
      _
    $region19: #{tpu_custom_call.1} parent=1 // pred_check_branch
      %39 = sbr.rel (0) target = $region21
    $region20: #{tpu_custom_call.1} parent=1 // pred_region
      %40 = dma.done [#allocation6], 256
    $region21: #{tpu_custom_call.1} parent=1 // pred_fallthru
      _
    %v41 = vld [vmem:[#allocation2] sm:$0xff]
    %v42 = vld [vmem:[#allocation5] sm:$0xff]
    %v43 = vld [vmem:[#allocation5 + $0x8] sm:$0xff]
    %v44 = vld [vmem:[%s2] sm:$0x1]
    %v46 = vlaneseq
    %v47 = vshrl.u32 %v46, 7
    %v48 = vsub.s32 0, %v47
    %v49 = vrot.slane %v44, %v48
    %vm51 = vcmask 130048
    %v53 = vsel %vm51, %v41, 0
    %55 = vmatprep.subr.mxu0 0.0
    %56 = vmatpush1.msra.mxu0 0.0
    %57 = vmatprep.subr.mxu0 0.0
    %58 = vmatpush1.msra.mxu0 0.0
    %59 = vmatprep.subr.mxu0 0.0
    %60 = vmatpush1.msra.mxu0 0.0
    %61 = vmatprep.subr.mxu0 0.0
    %62 = vmatpush1.msra.mxu0 0.0
    %63 = vmatprep.subr.mxu0 0.0
    %64 = vmatpush1.msra.mxu0 0.0
    %65 = vmatprep.subr.mxu0 0.0
    %66 = vmatpush1.msra.mxu0 0.0
    %67 = vmatprep.subr.mxu0 0.0
    %68 = vmatpush1.msra.mxu0 0.0
    %69 = vmatprep.subr.mxu0 0.0
    %70 = vmatpush1.msra.mxu0 0.0
    %71 = vmatprep.subr.mxu0 0.0
    %72 = vmatpush1.msra.mxu0 0.0
    %73 = vmatprep.subr.mxu0 0.0
    %74 = vmatpush1.msra.mxu0 0.0
    %75 = vmatprep.subr.mxu0 0.0
    %76 = vmatpush1.msra.mxu0 0.0
    %77 = vmatprep.subr.mxu0 0.0
    %78 = vmatpush1.msra.mxu0 0.0
    %79 = vmatprep.subr.mxu0 0.0
    %80 = vmatpush1.msra.mxu0 0.0
    %81 = vmatprep.subr.mxu0 0.0
    %82 = vmatpush1.msra.mxu0 0.0
    %83 = vmatprep.subr.mxu0 0.0
    %84 = vmatpush1.msra.mxu0 %v43
    %85 = vmatprep.subr.mxu0 0.0
    %86 = vmatpush1.msra.mxu0 %v42
    %87 = vmatprep.subr.mxu0 0.0
    %88 = vmatpush2.msra.mxu0 0.0
    %89 = vmatprep.subr.mxu0 0.0
    %90 = vmatpush2.msra.mxu0 0.0
    %91 = vmatprep.subr.mxu0 0.0
    %92 = vmatpush2.msra.mxu0 0.0
    %93 = vmatprep.subr.mxu0 0.0
    %94 = vmatpush2.msra.mxu0 0.0
    %95 = vmatprep.subr.mxu0 0.0
    %96 = vmatpush2.msra.mxu0 0.0
    %97 = vmatprep.subr.mxu0 0.0
    %98 = vmatpush2.msra.mxu0 0.0
    %99 = vmatprep.subr.mxu0 0.0
    %100 = vmatpush2.msra.mxu0 0.0
    %101 = vmatprep.subr.mxu0 0.0
    %102 = vmatpush2.msra.mxu0 0.0
    %103 = vmatprep.subr.mxu0 0.0
    %104 = vmatpush2.msra.mxu0 0.0
    %105 = vmatprep.subr.mxu0 0.0
    %106 = vmatpush2.msra.mxu0 0.0
    %107 = vmatprep.subr.mxu0 0.0
    %108 = vmatpush2.msra.mxu0 0.0
    %109 = vmatprep.subr.mxu0 0.0
    %110 = vmatpush2.msra.mxu0 0.0
    %111 = vmatprep.subr.mxu0 0.0
    %112 = vmatpush2.msra.mxu0 0.0
    %113 = vmatprep.subr.mxu0 0.0
    %114 = vmatpush2.msra.mxu0 0.0
    %115 = vmatprep.subr.mxu0 0.0
    %116 = vmatpush2.msra.mxu0 0.0
    %117 = vmatprep.subr.mxu0 0.0
    %118 = vmatpush2.msra.mxu0 0.0
    %119 = vmatprep.mubr.f32.mxu0 0.0
    %120 = vmatmul.mubr.f32.gmra.mxu0 %v53
    %v121 = vpop.f32.mrf.mxu0
    %v122 = vadd.f32 %v49, %v121
    %v123 = vpop.f32.mrf.mxu0
    %124 = vdwg.mxu0
    %v125 = vand.u32 2147483647, %v122
    %vm126 = vcmp.le.f32.partialorder %v125, 0.7853982
    %vm127 = vcmp.lt.s32.totalorder %v122, 0
    %v128 = vand.u32 %v122, 2139095040
    %v129 = vshrl.u32 %v128, 23
    %v130 = vsub.s32 %v129, 127
    %v131 = vand.u32 2147483647, %v122
    %v132 = vand.u32 %v131, 8388607
    %v133 = vor.u32 %v132, 8388608
    %v134 = vsub.s32 0, %v133
    %v135 = vadd.s32 %v130, 1
    %vm136 = vcmp.gt.s32.totalorder %v135, 0
    %v137 = vsel %vm136, %v135, 0
    %v138 = vshrl.u32 %v137, 5
    %v139 = vand.u32 %v137, 31
    %v140 = vsub.s32 32, %v139
    %v141 = vshrl.u32 683565275, %v140
    %v142 = vshll.u32 683565275, %v139
    %v143 = vshrl.u32 2475754826, %v140
    %v144 = vor.u32 %v142, %v143
    %v145 = vshll.u32 2475754826, %v139
    %v146 = vshrl.u32 2131351028, %v140
    %v147 = vor.u32 %v145, %v146
    %v148 = vshll.u32 2131351028, %v139
    %v149 = vshrl.u32 2102212464, %v140
    %v150 = vor.u32 %v148, %v149
    %v151 = vshll.u32 2102212464, %v139
    %v152 = vshrl.u32 920167782, %v140
    %v153 = vor.u32 %v151, %v152
    %v154 = vshll.u32 920167782, %v139
    %v155 = vshrl.u32 1326507024, %v140
    %v156 = vor.u32 %v154, %v155
    %vm157 = vcmp.lt.s32.totalorder %v138, 1
    %vm158 = vcmp.lt.s32.totalorder %v138, 2
    %vm159 = vcmp.lt.s32.totalorder %v138, 3
    %vm160 = vcmp.lt.s32.totalorder %v138, 4
    %v161 = vsel %vm157, %v141, %v144
    %v162 = vsel %vm160, %v150, 2102212464
    %v163 = vsel %vm159, %v147, %v162
    %v164 = vsel %vm158, %v161, %v163
    %v165 = vsel %vm157, %v144, %v147
    %v166 = vsel %vm160, %v153, 920167782
    %v167 = vsel %vm159, %v150, %v166
    %v168 = vsel %vm158, %v165, %v167
    %v169 = vsel %vm157, %v147, %v150
    %v170 = vsel %vm160, %v156, 1326507024
    %v171 = vsel %vm159, %v153, %v170
    %v172 = vsel %vm158, %v169, %v171
    %v173 = vshll.u32 %v133, 8
    %v174 = vmul.u32.u64.compose %v173, %v172
    %v175 = vextract.low.u32 %v174
    %v176 = vextract.high.u32 %v174
    %v177 = vmul.u32.u64.compose %v173, %v168
    %v178 = vextract.low.u32 %v177
    %v179 = vextract.high.u32 %v177
    %v180 = vmul.u32 %v173, %v164
    %v181 = vadd.s32 %v176, %v178
    %vm182 = vc.u32 %v176, %v178
    %v183 = vadd.s32 %v179, 1
    %v184 = vsel %vm182, %v183, %v179
    %v185 = vadd.s32 %v180, %v184
    %v186 = vadd.s32 %v185, 536870912
    %v187 = vshrl.u32 %v186, 30
    %v188 = vshll.u32 %v187, 30
    %v189 = vsub.s32 %v185, %v188
    %vm190 = vcmp.lt.s32.totalorder %v189, 0
    %v191 = vsub.s32 0, %v189
    %v192 = vsel %vm190, %v191, %v189
    %v193 = vclz %v192
    %v194 = vsub.s32 %v193, 2
    %vm195 = vcmp.gt.s32.totalorder 0, %v194
    %v196 = vsel %vm195, 0, %v194
    %v197 = vsub.s32 32, %v196
    %v198 = vshll.u32 %v189, %v196
    %v199 = vshrl.u32 %v181, %v197
    %v200 = vor.u32 %v198, %v199
    %v201 = vsub.s32 4294967266, %v196
    %v202 = vadd.s32 %v201, 127
    %v203 = vshll.u32 %v202, 23
    %v204 = vor.u32 4788187, %v203
    %v205 = vand.u32 2147483647, %v204
    %v207 = vcvt.s32.f32 %v200
    %v208 = vmul.f32 %v207, %v205
    %v209 = vxor.u32 %v208, 2147483648
    %v210 = vsel %vm127, %v209, %v208
    %v211 = vsub.s32 4, %v187
    %v212 = vsel %vm127, %v211, %v187
    %v213 = vsel %vm126, %v122, %v210
    %v214 = vsel %vm126, 0, %v212
    %v215 = vcosq.f32.pop %v213
    %v216 = vsinq.f32.pop %v213
    %vm217 = vweird.f32 %v122
    %v218 = vadd.s32 %v214, 3
    %v219 = vand.u32 %v218, 3
    %vm220 = vcmp.lt.s32.totalorder %v219, 2
    %vm221 = vcmp.eq.s32.totalorder %v219, 0
    %v222 = vxor.u32 %v216, 2147483648
    %v223 = vsel %vm221, %v215, %v222
    %vm224 = vcmp.eq.s32.totalorder %v219, 2
    %v225 = vxor.u32 %v215, 2147483648
    %v226 = vsel %vm224, %v225, %v216
    %v227 = vsel %vm220, %v223, %v226
    %v228 = vsel %vm217, nan, %v227
    %229 = vst [vmem:[#allocation7] sm:$0xff] %v228
    // Predicated region
    $region22: #{tpu_custom_call.1} parent=1 // pred_check
      _
    $region23: #{tpu_custom_call.1} parent=1 // pred_check_branch
      %231 = sbr.rel (0) target = $region25
    $region24: #{tpu_custom_call.1} parent=1 // pred_region
      %s233 = ssub.s32 128, 128
      %234 = vsyncadd [#allocation4], %s233
      %s236 = sshll.u32 [#allocation7], 4
      %s237 = int_to_ptr.vmem [resolvable:$true] %s236
      %239 = dma.vmem_to_hbm [thread:$0]  %s237, 128, %s3, [#allocation4]
    $region25: #{tpu_custom_call.1} parent=1 // pred_fallthru
      _
    // Predicated region
    $region26: #{tpu_custom_call.1} parent=1 // pred_check
      _
    $region27: #{tpu_custom_call.1} parent=1 // pred_check_branch
      %241 = sbr.rel (0) target = $region29
    $region28: #{tpu_custom_call.1} parent=1 // pred_region
      %242 = dma.done [#allocation4], 128
    $region29: #{tpu_custom_call.1} parent=1 // pred_fallthru
      _
    %243 = vsyncpa [#allocation3], 1
    %244 = vsyncpa [#allocation6], 1
    %245 = vsyncpa [#allocation4], 1

</llo_original>
